<compile_context>
chip_gen: v7x
topology: tpu7x:2x2x1
jax: 0.10.0
libtpu: 0.0.40
codegen_flags: <defaults>
</compile_context>

<pallas_src>
import functools

import jax
import jax.numpy as jnp
from jax.experimental import pallas as pl
from jax.experimental.pallas import tpu as pltpu

_LANE = 128          # vreg lane width
_SUBLANE = 8         # f32 sublane count
_PALLAS_MIN_BYTES = 1 << 20   # below this, use XLA's fused reduce


def _cdiv(a, b):
    return -(-a // b)


def _round_up(x, m):
    return _cdiv(x, m) * m


def _avg_pool_rows_kernel(x_ref, o_ref, acc_ref, *, inv_count, lane_tile,
                          n_lane_steps, last_valid):
    """Row-wise mean over a (R, L) view processed as (TR, TL) blocks.

    grid = (row_blocks, lane_blocks); the lane (reduction) axis is last and
    'arbitrary'.  acc_ref is a (TR, 128) f32 lane-partial accumulator that
    persists across the reduction axis.  `last_valid` (static) is the number
    of valid lanes in the final lane block; lanes beyond it hold DMA garbage
    (no HBM padding was done) and are zeroed with a static mask.
    """
    k = pl.program_id(1)

    @pl.when(k == 0)
    def _():
        acc_ref[...] = jnp.zeros_like(acc_ref)

    n_chunks = lane_tile // _LANE   # lane_tile is always a multiple of 128

    def add_chunks(n_full, tail_valid):
        # Per-chunk load + f32 cast (no whole-tile staging copy); accumulate
        # each 128-lane chunk directly into the VMEM accumulator so the live
        # vreg set stays bounded even for large row tiles.  All VPU work.
        for j in range(n_full):
            acc_ref[...] += x_ref[:, j * _LANE:(j + 1) * _LANE].astype(jnp.float32)
        if tail_valid:
            j = n_full
            tail = x_ref[:, j * _LANE:(j + 1) * _LANE].astype(jnp.float32)
            lane = jax.lax.broadcasted_iota(jnp.int32, (1, _LANE), 1)
            acc_ref[...] += jnp.where(lane < tail_valid, tail, jnp.float32(0.0))

    if last_valid == lane_tile:
        # Every lane block is fully valid -> no masking anywhere.
        add_chunks(n_chunks, 0)
    elif n_lane_steps == 1:
        # Single lane block with a partial tail (the SlowFast production
        # path: L = T*7*7 is never a multiple of 128).
        add_chunks(last_valid // _LANE, last_valid % _LANE)
    else:
        @pl.when(k < n_lane_steps - 1)
        def _():
            add_chunks(n_chunks, 0)

        @pl.when(k == n_lane_steps - 1)
        def _():
            add_chunks(last_valid // _LANE, last_valid % _LANE)

    @pl.when(k == n_lane_steps - 1)
    def _():
        # The only cross-lane (XLU) reduce: once per row block over 128 lanes.
        total = jnp.sum(acc_ref[...], axis=-1, keepdims=True)   # (TR, 1)
        o_ref[...] = (total * jnp.float32(inv_count)).astype(o_ref.dtype)


def _choose_tiles(R, L, itemsize, row_block, lane_block, vmem_capacity):
    """Pick (tr, tl, n_row, n_lane, last_valid, big_vmem)."""
    # Packed-dtype sublane multiple: 8 for f32, 16 for bf16, 32 for int8/fp8.
    sub = max(_SUBLANE, 32 // max(1, itemsize))

    if vmem_capacity is None:
        vmem_capacity = 64 << 20                  # assume v7x (smallest VMEM)
    big_vmem = vmem_capacity >= (96 << 20)        # v5e / v6e: 128 MiB

    per_buffer_budget = (20 << 20) if big_vmem else (8 << 20)
    max_lane_tile = 16384 if big_vmem else 8192

    # Lane (reduction) tile: always a multiple of 128 lanes.
    if lane_block is not None:
        tl = max(_LANE, _round_up(lane_block, _LANE))
    else:
        tl = min(_round_up(L, _LANE), max_lane_tile)
    n_lane = _cdiv(L, tl)
    last_valid = L - (n_lane - 1) * tl            # valid lanes in last block

    # Row tile: as large as the per-buffer budget allows.
    r_ceil = _round_up(R, sub)
    if row_block is not None:
        tr = min(_round_up(row_block, sub), r_ceil)
    else:
        tr = max(sub, (per_buffer_budget // (tl * itemsize)) // sub * sub)
        tr = min(tr, r_ceil)
        # Keep >= 2 row blocks when the input is big enough that both v7x
        # TensorCores should get work; near-free on single-TC parts since the
        # blocks stay multi-MiB.
        if _cdiv(R, tr) < 2 and r_ceil >= 2 * sub and R * L * itemsize >= (2 << 20):
            tr = _round_up(_cdiv(r_ceil, 2), sub)
    n_row = _cdiv(R, tr)
    return tr, tl, n_row, n_lane, last_valid, big_vmem


def global_avg_pool_3d(x, *, row_block=None, lane_block=None,
                       min_pallas_bytes=_PALLAS_MIN_BYTES):
    """AdaptiveAvgPool3d((1,1,1)) equivalent: (N,C,T,H,W) -> (N,C,1,1,1)."""
    N, C, T, H, W = x.shape
    R = N * C
    L = T * H * W
    itemsize = jnp.dtype(x.dtype).itemsize

    # Tiny inputs: the fixed pallas_call launch + pipeline ramp dominates;
    # XLA's fused reduce is faster.  Same numerics (f32 accumulation).
    if R * L * itemsize < min_pallas_bytes:
        return jnp.mean(x.astype(jnp.float32), axis=(2, 3, 4),
                        keepdims=True).astype(x.dtype)

    try:
        info = pltpu.get_tpu_info()
        vmem_capacity = int(getattr(info, "vmem_capacity_bytes", 0)) or None
    except Exception:
        vmem_capacity = None

    tr, tl, n_row, n_lane, last_valid, big_vmem = _choose_tiles(
        R, L, itemsize, row_block, lane_block, vmem_capacity)

    xf = x.reshape(R, L)                      # pure view; no padding copy
    grid = (n_row, n_lane)

    block_bytes = tr * tl * itemsize
    acc_bytes = tr * _LANE * 4
    out_bytes = 2 * tr * itemsize
    # Keep headroom below physical VMEM: 48 MiB cap on 64-MiB parts (v7x),
    # 100 MiB on 128-MiB parts (v5e/v6e).
    vmem_cap = (100 << 20) if big_vmem else (48 << 20)

    # Triple-buffer the input when the grid is long enough for it to help
    # (hides the ~0.35 us per-step gap, mainly on v7x) and it still fits.
    buffer_count = 2
    in_spec = None
    if (n_row * n_lane >= 3
            and 3 * block_bytes + acc_bytes + out_bytes + (4 << 20) <= vmem_cap):
        try:
            in_spec = pl.BlockSpec((tr, tl), lambda i, k: (i, k),
                                   pipeline_mode=pl.Buffered(3))
            buffer_count = 3
        except Exception:
            in_spec = None
            buffer_count = 2
    if in_spec is None:
        in_spec = pl.BlockSpec((tr, tl), lambda i, k: (i, k))

    vmem_needed = buffer_count * block_bytes + acc_bytes + out_bytes
    vmem_limit = int(min(vmem_cap, max(32 << 20, vmem_needed + (4 << 20))))

    kernel = functools.partial(_avg_pool_rows_kernel,
                               inv_count=1.0 / float(L),
                               lane_tile=tl,
                               n_lane_steps=n_lane,
                               last_valid=last_valid)

    cost = pl.CostEstimate(
        flops=R * L,                               # one add per element
        transcendentals=0,
        bytes_accessed=R * L * itemsize + R * itemsize)

    pooled = pl.pallas_call(
        kernel,
        out_shape=jax.ShapeDtypeStruct((R, 1), x.dtype),
        grid=grid,
        in_specs=[in_spec],
        out_specs=pl.BlockSpec((tr, 1), lambda i, k: (i, 0)),
        scratch_shapes=[pltpu.VMEM((tr, _LANE), jnp.float32)],
        compiler_params=pltpu.CompilerParams(
            dimension_semantics=("parallel", "arbitrary"),
            vmem_limit_bytes=vmem_limit),
        cost_estimate=cost,
    )(xf)

    return pooled.reshape(N, C, 1, 1, 1)


@functools.partial(jax.jit, static_argnames=("min_pallas_bytes",))
def slowfast_spatial_temporal_module(x_slow, x_fast, *,
                                     min_pallas_bytes=_PALLAS_MIN_BYTES):
    """Forward pass of SlowFastSpatialTemporalModule: adaptive avg pool to
    (1,1,1) on each pathway, then channel concat of
    [slow] + [fast] * (C_slow // C_fast).

    Note: the repeat count uses floor division, matching PyTorch's
    list-repeat semantics (silently truncates if C_slow % C_fast != 0).
    """
    ps = global_avg_pool_3d(x_slow, min_pallas_bytes=min_pallas_bytes)
    pf = global_avg_pool_3d(x_fast, min_pallas_bytes=min_pallas_bytes)
    ratio = ps.shape[1] // pf.shape[1]
    return jnp.concatenate([ps] + [pf] * ratio, axis=1)


if __name__ == "__main__":
    key = jax.random.PRNGKey(0)
    k_slow, k_fast, k_odd, k_small, k_big = jax.random.split(key, 5)

    # Small SlowFast-style shapes: slow pathway has more channels / fewer
    # frames, fast pathway has fewer channels / more frames.
    N = 2
    C_slow, T_slow = 16, 4
    C_fast, T_fast = 4, 8
    H = W = 8

    x_slow = jax.random.normal(k_slow, (N, C_slow, T_slow, H, W), jnp.float32)
    x_fast = jax.random.normal(k_fast, (N, C_fast, T_fast, H, W), jnp.float32)

    # Force the Pallas path at demo sizes so the kernel itself runs on TPU.
    out = slowfast_spatial_temporal_module(x_slow, x_fast, min_pallas_bytes=0)
    out = jax.block_until_ready(out)

    # Reference check against plain-JAX semantics of the PyTorch module.
    ref_slow = jnp.mean(x_slow, axis=(2, 3, 4), keepdims=True)
    ref_fast = jnp.mean(x_fast, axis=(2, 3, 4), keepdims=True)
    ratio = C_slow // C_fast
    ref = jnp.concatenate([ref_slow] + [ref_fast] * ratio, axis=1)

    assert out.shape == (N, C_slow + C_fast * ratio, 1, 1, 1), out.shape
    assert jnp.allclose(out, ref, atol=1e-5, rtol=1e-5)

    # Default path (tiny inputs take the XLA-fallback branch; same numerics).
    out2 = jax.block_until_ready(slowfast_spatial_temporal_module(x_slow, x_fast))
    assert jnp.allclose(out2, ref, atol=1e-5, rtol=1e-5)

    # Regression coverage for the un-padded / masked paths.
    def _check_pool(x, tol=1e-5, **kw):
        got = jax.block_until_ready(
            global_avg_pool_3d(x, min_pallas_bytes=0, **kw))
        want = jnp.mean(x.astype(jnp.float32), axis=(2, 3, 4),
                        keepdims=True).astype(x.dtype)
        assert got.shape == want.shape, (got.shape, want.shape)
        assert jnp.allclose(got.astype(jnp.float32), want.astype(jnp.float32),
                            atol=tol, rtol=tol)

    _check_pool(x_fast, lane_block=128)          # L=512 -> 4 aligned reduction steps
    x_prod = jax.random.normal(k_big, (2, 64, 8, 7, 7), jnp.float32)
    _check_pool(x_prod)                          # production 7x7: L=392, masked tail
    x_odd = jax.random.normal(k_odd, (1, 12, 3, 7, 7), jnp.float32)
    _check_pool(x_odd)                           # ragged rows + single masked block
    _check_pool(x_odd, lane_block=128)           # L=147 split: 19-lane masked tail step
    x_tiny = jax.random.normal(k_small, (1, 8, 2, 5, 5), jnp.float32)
    _check_pool(x_tiny)                          # L=50 < 128: single masked chunk
    _check_pool(x_prod.astype(jnp.bfloat16), tol=1e-2)   # packed-sublane rows, f32 acc
    x_large = jax.random.normal(k_big, (2, 32, 4, 56, 56), jnp.float32)
    _check_pool(x_large)                         # multi-step pipeline, no overrides

    print("KERNEL_OK")
</pallas_src>

<mosaic_0001>
module attributes {stable_mosaic.version = 11 : i64} {
  func.func @_avg_pool_rows_kernel(%arg0: i32, %arg1: i32, %arg2: memref<32x256xf32, #tpu.memory_space<vmem>>, %arg3: memref<32x1xf32, #tpu.memory_space<vmem>>, %arg4: memref<32x128xf32, #tpu.memory_space<vmem>>) attributes {dimension_semantics = [#tpu.dimension_semantics<parallel>, #tpu.dimension_semantics<arbitrary>], iteration_bounds = array<i64: 1, 1>, scalar_prefetch = 0 : i64, scratch_operands = 1 : i64, tpu.core_type = #tpu.core_type<tc>, window_params = [{transform_indices = @transform_0, window_bounds = array<i64: 32, 256>}, {transform_indices = @transform_1, window_bounds = array<i64: 32, 1>}]} {
    %c0_i32 = arith.constant 0 : i32
    %0 = arith.cmpi eq, %arg1, %c0_i32 : i32
    %1 = arith.extui %0 : i1 to i32
    %c0_i32_0 = arith.constant 0 : i32
    %2 = arith.cmpi ne, %1, %c0_i32_0 : i32
    scf.if %2 {
      %cst = arith.constant 0.000000e+00 : f32
      %14 = vector.broadcast %cst : f32 to vector<32x128xf32>
      %c0_13 = arith.constant 0 : index
      %c0_14 = arith.constant 0 : index
      %15 = vector.load %arg4[%c0_13, %c0_14] : memref<32x128xf32, #tpu.memory_space<vmem>>, vector<32x128xf32>
      tpu.vector_store %arg4[%c0_13, %c0_14], %14 {strides = array<i32>} : memref<32x128xf32, #tpu.memory_space<vmem>>, vector<32x128xf32>,
    } else {
    }
    %c0 = arith.constant 0 : index
    %c0_1 = arith.constant 0 : index
    %3 = vector.load %arg4[%c0, %c0_1] : memref<32x128xf32, #tpu.memory_space<vmem>>, vector<32x128xf32>
    %c0_2 = arith.constant 0 : index
    %c0_3 = arith.constant 0 : index
    %4 = vector.load %arg2[%c0_2, %c0_3] : memref<32x256xf32, #tpu.memory_space<vmem>>, vector<32x128xf32>
    %5 = arith.addf %3, %4 : vector<32x128xf32>
    %c0_4 = arith.constant 0 : index
    %c0_5 = arith.constant 0 : index
    %6 = vector.load %arg4[%c0_4, %c0_5] : memref<32x128xf32, #tpu.memory_space<vmem>>, vector<32x128xf32>
    tpu.vector_store %arg4[%c0_4, %c0_5], %5 {strides = array<i32>} : memref<32x128xf32, #tpu.memory_space<vmem>>, vector<32x128xf32>,
    %c0_6 = arith.constant 0 : index
    %c0_7 = arith.constant 0 : index
    %7 = vector.load %arg4[%c0_6, %c0_7] : memref<32x128xf32, #tpu.memory_space<vmem>>, vector<32x128xf32>
    %c0_8 = arith.constant 0 : index
    %c128 = arith.constant 128 : index
    %8 = vector.load %arg2[%c0_8, %c128] : memref<32x256xf32, #tpu.memory_space<vmem>>, vector<32x128xf32>
    %9 = arith.addf %7, %8 : vector<32x128xf32>
    %c0_9 = arith.constant 0 : index
    %c0_10 = arith.constant 0 : index
    %10 = vector.load %arg4[%c0_9, %c0_10] : memref<32x128xf32, #tpu.memory_space<vmem>>, vector<32x128xf32>
    tpu.vector_store %arg4[%c0_9, %c0_10], %9 {strides = array<i32>} : memref<32x128xf32, #tpu.memory_space<vmem>>, vector<32x128xf32>,
    %c0_i32_11 = arith.constant 0 : i32
    %11 = arith.cmpi eq, %arg1, %c0_i32_11 : i32
    %12 = arith.extui %11 : i1 to i32
    %c0_i32_12 = arith.constant 0 : i32
    %13 = arith.cmpi ne, %12, %c0_i32_12 : i32
    scf.if %13 {
      %c0_13 = arith.constant 0 : index
      %c0_14 = arith.constant 0 : index
      %14 = vector.load %arg4[%c0_13, %c0_14] : memref<32x128xf32, #tpu.memory_space<vmem>>, vector<32x128xf32>
      %cst = arith.constant dense<0.000000e+00> : vector<32xf32>
      %15 = vector.multi_reduction <add>, %14, %cst [1] : vector<32x128xf32> to vector<32xf32>
      %16 = vector.shape_cast %15 : vector<32xf32> to vector<32x1xf32>
      %cst_15 = arith.constant 3.906250e-03 : f32
      %17 = vector.broadcast %cst_15 : f32 to vector<32x1xf32>
      %18 = arith.mulf %16, %17 : vector<32x1xf32>
      %c0_16 = arith.constant 0 : index
      %c0_17 = arith.constant 0 : index
      %19 = vector.load %arg3[%c0_16, %c0_17] : memref<32x1xf32, #tpu.memory_space<vmem>>, vector<32x1xf32>
      tpu.vector_store %arg3[%c0_16, %c0_17], %18 {strides = array<i32>} : memref<32x1xf32, #tpu.memory_space<vmem>>, vector<32x1xf32>,
    } else {
    }
    return
  }
  func.func @transform_0(%arg0: i32, %arg1: i32) -> (i32, i32) {
    %c0_i32 = arith.constant 0 : i32
    return %arg0, %arg1 : i32, i32
  }
  func.func @transform_1(%arg0: i32, %arg1: i32) -> (i32, i32) {
    %c0_i32 = arith.constant 0 : i32
    %c0_i32_0 = arith.constant 0 : i32
    return %arg0, %c0_i32 : i32, i32
  }
}

module attributes {stable_mosaic.version = 11 : i64} {
  func.func @_avg_pool_rows_kernel(%arg0: i32, %arg1: i32, %arg2: memref<8x512xf32, #tpu.memory_space<vmem>>, %arg3: memref<8x1xf32, #tpu.memory_space<vmem>>, %arg4: memref<8x128xf32, #tpu.memory_space<vmem>>) attributes {dimension_semantics = [#tpu.dimension_semantics<parallel>, #tpu.dimension_semantics<arbitrary>], iteration_bounds = array<i64: 1, 1>, scalar_prefetch = 0 : i64, scratch_operands = 1 : i64, tpu.core_type = #tpu.core_type<tc>, window_params = [{transform_indices = @transform_0, window_bounds = array<i64: 8, 512>}, {transform_indices = @transform_1, window_bounds = array<i64: 8, 1>}]} {
    %c0_i32 = arith.constant 0 : i32
    %0 = arith.cmpi eq, %arg1, %c0_i32 : i32
    %1 = arith.extui %0 : i1 to i32
    %c0_i32_0 = arith.constant 0 : i32
    %2 = arith.cmpi ne, %1, %c0_i32_0 : i32
    scf.if %2 {
      %cst = arith.constant 0.000000e+00 : f32
      %22 = vector.broadcast %cst : f32 to vector<8x128xf32>
      %c0_23 = arith.constant 0 : index
      %c0_24 = arith.constant 0 : index
      %23 = vector.load %arg4[%c0_23, %c0_24] : memref<8x128xf32, #tpu.memory_space<vmem>>, vector<8x128xf32>
      tpu.vector_store %arg4[%c0_23, %c0_24], %22 {strides = array<i32>} : memref<8x128xf32, #tpu.memory_space<vmem>>, vector<8x128xf32>,
    } else {
    }
    %c0 = arith.constant 0 : index
    %c0_1 = arith.constant 0 : index
    %3 = vector.load %arg4[%c0, %c0_1] : memref<8x128xf32, #tpu.memory_space<vmem>>, vector<8x128xf32>
    %c0_2 = arith.constant 0 : index
    %c0_3 = arith.constant 0 : index
    %4 = vector.load %arg2[%c0_2, %c0_3] : memref<8x512xf32, #tpu.memory_space<vmem>>, vector<8x128xf32>
    %5 = arith.addf %3, %4 : vector<8x128xf32>
    %c0_4 = arith.constant 0 : index
    %c0_5 = arith.constant 0 : index
    %6 = vector.load %arg4[%c0_4, %c0_5] : memref<8x128xf32, #tpu.memory_space<vmem>>, vector<8x128xf32>
    tpu.vector_store %arg4[%c0_4, %c0_5], %5 {strides = array<i32>} : memref<8x128xf32, #tpu.memory_space<vmem>>, vector<8x128xf32>,
    %c0_6 = arith.constant 0 : index
    %c0_7 = arith.constant 0 : index
    %7 = vector.load %arg4[%c0_6, %c0_7] : memref<8x128xf32, #tpu.memory_space<vmem>>, vector<8x128xf32>
    %c0_8 = arith.constant 0 : index
    %c128 = arith.constant 128 : index
    %8 = vector.load %arg2[%c0_8, %c128] : memref<8x512xf32, #tpu.memory_space<vmem>>, vector<8x128xf32>
    %9 = arith.addf %7, %8 : vector<8x128xf32>
    %c0_9 = arith.constant 0 : index
    %c0_10 = arith.constant 0 : index
    %10 = vector.load %arg4[%c0_9, %c0_10] : memref<8x128xf32, #tpu.memory_space<vmem>>, vector<8x128xf32>
    tpu.vector_store %arg4[%c0_9, %c0_10], %9 {strides = array<i32>} : memref<8x128xf32, #tpu.memory_space<vmem>>, vector<8x128xf32>,
    %c0_11 = arith.constant 0 : index
    %c0_12 = arith.constant 0 : index
    %11 = vector.load %arg4[%c0_11, %c0_12] : memref<8x128xf32, #tpu.memory_space<vmem>>, vector<8x128xf32>
    %c0_13 = arith.constant 0 : index
    %c256 = arith.constant 256 : index
    %12 = vector.load %arg2[%c0_13, %c256] : memref<8x512xf32, #tpu.memory_space<vmem>>, vector<8x128xf32>
    %13 = arith.addf %11, %12 : vector<8x128xf32>
    %c0_14 = arith.constant 0 : index
    %c0_15 = arith.constant 0 : index
    %14 = vector.load %arg4[%c0_14, %c0_15] : memref<8x128xf32, #tpu.memory_space<vmem>>, vector<8x128xf32>
    tpu.vector_store %arg4[%c0_14, %c0_15], %13 {strides = array<i32>} : memref<8x128xf32, #tpu.memory_space<vmem>>, vector<8x128xf32>,
    %c0_16 = arith.constant 0 : index
    %c0_17 = arith.constant 0 : index
    %15 = vector.load %arg4[%c0_16, %c0_17] : memref<8x128xf32, #tpu.memory_space<vmem>>, vector<8x128xf32>
    %c0_18 = arith.constant 0 : index
    %c384 = arith.constant 384 : index
    %16 = vector.load %arg2[%c0_18, %c384] : memref<8x512xf32, #tpu.memory_space<vmem>>, vector<8x128xf32>
    %17 = arith.addf %15, %16 : vector<8x128xf32>
    %c0_19 = arith.constant 0 : index
    %c0_20 = arith.constant 0 : index
    %18 = vector.load %arg4[%c0_19, %c0_20] : memref<8x128xf32, #tpu.memory_space<vmem>>, vector<8x128xf32>
    tpu.vector_store %arg4[%c0_19, %c0_20], %17 {strides = array<i32>} : memref<8x128xf32, #tpu.memory_space<vmem>>, vector<8x128xf32>,
    %c0_i32_21 = arith.constant 0 : i32
    %19 = arith.cmpi eq, %arg1, %c0_i32_21 : i32
    %20 = arith.extui %19 : i1 to i32
    %c0_i32_22 = arith.constant 0 : i32
    %21 = arith.cmpi ne, %20, %c0_i32_22 : i32
    scf.if %21 {
      %c0_23 = arith.constant 0 : index
      %c0_24 = arith.constant 0 : index
      %22 = vector.load %arg4[%c0_23, %c0_24] : memref<8x128xf32, #tpu.memory_space<vmem>>, vector<8x128xf32>
      %cst = arith.constant dense<0.000000e+00> : vector<8xf32>
      %23 = vector.multi_reduction <add>, %22, %cst [1] : vector<8x128xf32> to vector<8xf32>
      %24 = vector.shape_cast %23 : vector<8xf32> to vector<8x1xf32>
      %cst_25 = arith.constant 0.001953125 : f32
      %25 = vector.broadcast %cst_25 : f32 to vector<8x1xf32>
      %26 = arith.mulf %24, %25 : vector<8x1xf32>
      %c0_26 = arith.constant 0 : index
      %c0_27 = arith.constant 0 : index
      %27 = vector.load %arg3[%c0_26, %c0_27] : memref<8x1xf32, #tpu.memory_space<vmem>>, vector<8x1xf32>
      tpu.vector_store %arg3[%c0_26, %c0_27], %26 {strides = array<i32>} : memref<8x1xf32, #tpu.memory_space<vmem>>, vector<8x1xf32>,
    } else {
    }
    return
  }
  func.func @transform_0(%arg0: i32, %arg1: i32) -> (i32, i32) {
    %c0_i32 = arith.constant 0 : i32
    return %arg0, %arg1 : i32, i32
  }
  func.func @transform_1(%arg0: i32, %arg1: i32) -> (i32, i32) {
    %c0_i32 = arith.constant 0 : i32
    %c0_i32_0 = arith.constant 0 : i32
    return %arg0, %c0_i32 : i32, i32
  }
}

</mosaic_0001>

<llo_original>
// kernel: slowfast_spatial_temporal_module.2
$region0: #{slowfast_spatial_temporal_module.2}
  #allocation0 [shape = 'u32[]', space=smem, size = 0x4, offset = 0x4, fixed_abs, tag = 'smem constant byte address 0x4 - core index']
  #allocation1 [shape = 'u32[144,128]{1,0:T(1,128)}', space=vmem, size = 0x12000, scoped, tag = 'internal scratch']
  #allocation2 [shape = 'f32[32,128]{1,0:T(8,128)}', space=vmem, size = 0x4000, scoped, tag = 'scratch operand']
  %s0 = inlined_call_operand.vmem [shape: f32[32,256], index: 0, kind: input, shape index: {}]
  %s1 = inlined_call_operand.vmem [shape: f32[32,1], index: 1, kind: output, shape index: {}]
  %s2 = sld [smem:[#allocation0]]
  $region22: #{slowfast_spatial_temporal_module.2} parent=0
    _
  %s4 = ssub.s32 1, %s2
  %s5 = scalar_select 0, %s4, %s2
  // Predicated region
  $region2: #{slowfast_spatial_temporal_module.2} parent=0 // pred_check
    _
  $region3: #{slowfast_spatial_temporal_module.2} parent=0 // pred_check_branch
    %7 = sbr.rel (0) target = $region5
  $region4: #{slowfast_spatial_temporal_module.2} parent=0 // pred_region
    _
  $region5: #{slowfast_spatial_temporal_module.2} parent=0 // pred_fallthru
    _
  %p8 = scmp.eq.s32.totalorder 0, 0
  // Predicated region
  $region6: #{slowfast_spatial_temporal_module.2} parent=0 // pred_check
    %p9 = pneg %p8
  $region7: #{slowfast_spatial_temporal_module.2} parent=0 // pred_check_branch
    %11 = sbr.rel (%p9) target = $region9
  $region8: #{slowfast_spatial_temporal_module.2} parent=0 // pred_region
    %12 = vst [vmem:[#allocation2] sm:$0xff] 0.0
    %13 = vst [vmem:[#allocation2 + $0x8] sm:$0xff] 0.0
    %14 = vst [vmem:[#allocation2 + $0x10] sm:$0xff] 0.0
    %15 = vst [vmem:[#allocation2 + $0x18] sm:$0xff] 0.0
  $region9: #{slowfast_spatial_temporal_module.2} parent=0 // pred_fallthru
    _
  %v16 = vld [vmem:[#allocation2] sm:$0xff]
  %v17 = vld [vmem:[#allocation2 + $0x8] sm:$0xff]
  %v18 = vld [vmem:[#allocation2 + $0x10] sm:$0xff]
  %v19 = vld [vmem:[#allocation2 + $0x18] sm:$0xff]
  %v20 = vld [vmem:[%s0] sm:$0xff]
  %v21 = vld [vmem:[%s0 + $0x10] sm:$0xff]
  %v22 = vld [vmem:[%s0 + $0x20] sm:$0xff]
  %v23 = vld [vmem:[%s0 + $0x30] sm:$0xff]
  %v24 = vadd.f32 %v16, %v20
  %v25 = vadd.f32 %v17, %v21
  %v26 = vadd.f32 %v18, %v22
  %v27 = vadd.f32 %v19, %v23
  %28 = vst [vmem:[#allocation2] sm:$0xff] %v24
  %29 = vst [vmem:[#allocation2 + $0x8] sm:$0xff] %v25
  %30 = vst [vmem:[#allocation2 + $0x10] sm:$0xff] %v26
  %31 = vst [vmem:[#allocation2 + $0x18] sm:$0xff] %v27
  %v32 = vld [vmem:[#allocation2] sm:$0xff]
  %v33 = vld [vmem:[#allocation2 + $0x8] sm:$0xff]
  %v34 = vld [vmem:[#allocation2 + $0x10] sm:$0xff]
  %v35 = vld [vmem:[#allocation2 + $0x18] sm:$0xff]
  %v36 = vld [vmem:[%s0 + $0x8] sm:$0xff]
  %v37 = vld [vmem:[%s0 + $0x18] sm:$0xff]
  %v38 = vld [vmem:[%s0 + $0x28] sm:$0xff]
  %v39 = vld [vmem:[%s0 + $0x38] sm:$0xff]
  %v40 = vadd.f32 %v32, %v36
  %v41 = vadd.f32 %v33, %v37
  %v42 = vadd.f32 %v34, %v38
  %v43 = vadd.f32 %v35, %v39
  %44 = vst [vmem:[#allocation2] sm:$0xff] %v40
  %45 = vst [vmem:[#allocation2 + $0x8] sm:$0xff] %v41
  %46 = vst [vmem:[#allocation2 + $0x10] sm:$0xff] %v42
  %47 = vst [vmem:[#allocation2 + $0x18] sm:$0xff] %v43
  // Predicated region
  $region10: #{slowfast_spatial_temporal_module.2} parent=0 // pred_check
    %p48 = pneg %p8
  $region11: #{slowfast_spatial_temporal_module.2} parent=0 // pred_check_branch
    %50 = sbr.rel (%p48) target = $region13
  $region12: #{slowfast_spatial_temporal_module.2} parent=0 // pred_region
    %v51 = vld [vmem:[#allocation2] sm:$0xff]
    %v52 = vld [vmem:[#allocation2 + $0x8] sm:$0xff]
    %v53 = vld [vmem:[#allocation2 + $0x10] sm:$0xff]
    %v54 = vld [vmem:[#allocation2 + $0x18] sm:$0xff]
    %55 = vadd.xlane.f32.xlu0 %v51
    %v56 = vpop.xlane.xlu0 %55
    %57 = vadd.xlane.f32.xlu0 %v52
    %v58 = vpop.xlane.xlu0 %57
    %59 = vadd.xlane.f32.xlu0 %v53
    %v60 = vpop.xlane.xlu0 %59
    %61 = vadd.xlane.f32.xlu0 %v54
    %v62 = vpop.xlane.xlu0 %61
    %v63 = vmul.f32 %v56, 0.00390625
    %v64 = vmul.f32 %v58, 0.00390625
    %v65 = vmul.f32 %v60, 0.00390625
    %v66 = vmul.f32 %v62, 0.00390625
    %vm67 = vcmask 7168
    %68 = vst.msk [vmem:[%s1] sm:$0xff] %vm67, %v63
    %69 = vst.msk [vmem:[%s1 + $0x8] sm:$0xff] %vm67, %v64
    %70 = vst.msk [vmem:[%s1 + $0x10] sm:$0xff] %vm67, %v65
    %71 = vst.msk [vmem:[%s1 + $0x18] sm:$0xff] %vm67, %v66
  $region13: #{slowfast_spatial_temporal_module.2} parent=0 // pred_fallthru
    _
  // Predicated region
  $region14: #{slowfast_spatial_temporal_module.2} parent=0 // pred_check
    _
  $region15: #{slowfast_spatial_temporal_module.2} parent=0 // pred_check_branch
    %73 = sbr.rel (0) target = $region17
  $region16: #{slowfast_spatial_temporal_module.2} parent=0 // pred_region
    _
  $region17: #{slowfast_spatial_temporal_module.2} parent=0 // pred_fallthru
    _
  // Predicated region
  $region18: #{slowfast_spatial_temporal_module.2} parent=0 // pred_check
    _
  $region19: #{slowfast_spatial_temporal_module.2} parent=0 // pred_check_branch
    %75 = sbr.rel (0) target = $region21
  $region20: #{slowfast_spatial_temporal_module.2} parent=0 // pred_region
    _
  $region21: #{slowfast_spatial_temporal_module.2} parent=0 // pred_fallthru
    _

// kernel: slowfast_spatial_temporal_module.3
$region0: #{slowfast_spatial_temporal_module.3}
  #allocation0 [shape = 'u32[]', space=smem, size = 0x4, offset = 0x4, fixed_abs, tag = 'smem constant byte address 0x4 - core index']
  #allocation1 [shape = 'u32[144,128]{1,0:T(1,128)}', space=vmem, size = 0x12000, scoped, tag = 'internal scratch']
  #allocation2 [shape = 'f32[8,128]{1,0:T(8,128)}', space=vmem, size = 0x1000, scoped, tag = 'scratch operand']
  %s0 = inlined_call_operand.vmem [shape: f32[8,512], index: 0, kind: input, shape index: {}]
  %s1 = inlined_call_operand.vmem [shape: f32[8,1], index: 1, kind: output, shape index: {}]
  %s2 = sld [smem:[#allocation0]]
  $region22: #{slowfast_spatial_temporal_module.3} parent=0
    _
  %s4 = ssub.s32 1, %s2
  %s5 = scalar_select 0, %s4, %s2
  // Predicated region
  $region2: #{slowfast_spatial_temporal_module.3} parent=0 // pred_check
    _
  $region3: #{slowfast_spatial_temporal_module.3} parent=0 // pred_check_branch
    %7 = sbr.rel (0) target = $region5
  $region4: #{slowfast_spatial_temporal_module.3} parent=0 // pred_region
    _
  $region5: #{slowfast_spatial_temporal_module.3} parent=0 // pred_fallthru
    _
  %p8 = scmp.eq.s32.totalorder 0, 0
  // Predicated region
  $region6: #{slowfast_spatial_temporal_module.3} parent=0 // pred_check
    %p9 = pneg %p8
  $region7: #{slowfast_spatial_temporal_module.3} parent=0 // pred_check_branch
    %11 = sbr.rel (%p9) target = $region9
  $region8: #{slowfast_spatial_temporal_module.3} parent=0 // pred_region
    %12 = vst [vmem:[#allocation2] sm:$0xff] 0.0
  $region9: #{slowfast_spatial_temporal_module.3} parent=0 // pred_fallthru
    _
  %v13 = vld [vmem:[#allocation2] sm:$0xff]
  %v14 = vld [vmem:[%s0] sm:$0xff]
  %v15 = vadd.f32 %v13, %v14
  %16 = vst [vmem:[#allocation2] sm:$0xff] %v15
  %v17 = vld [vmem:[#allocation2] sm:$0xff]
  %v18 = vld [vmem:[%s0 + $0x8] sm:$0xff]
  %v19 = vadd.f32 %v17, %v18
  %20 = vst [vmem:[#allocation2] sm:$0xff] %v19
  %v21 = vld [vmem:[#allocation2] sm:$0xff]
  %v22 = vld [vmem:[%s0 + $0x10] sm:$0xff]
  %v23 = vadd.f32 %v21, %v22
  %24 = vst [vmem:[#allocation2] sm:$0xff] %v23
  %v25 = vld [vmem:[#allocation2] sm:$0xff]
  %v26 = vld [vmem:[%s0 + $0x18] sm:$0xff]
  %v27 = vadd.f32 %v25, %v26
  %28 = vst [vmem:[#allocation2] sm:$0xff] %v27
  // Predicated region
  $region10: #{slowfast_spatial_temporal_module.3} parent=0 // pred_check
    %p29 = pneg %p8
  $region11: #{slowfast_spatial_temporal_module.3} parent=0 // pred_check_branch
    %31 = sbr.rel (%p29) target = $region13
  $region12: #{slowfast_spatial_temporal_module.3} parent=0 // pred_region
    %v32 = vld [vmem:[#allocation2] sm:$0xff]
    %33 = vadd.xlane.f32.xlu0 %v32
    %v34 = vpop.xlane.xlu0 %33
    %v35 = vmul.f32 %v34, 0.001953125
    %vm36 = vcmask 7168
    %37 = vst.msk [vmem:[%s1] sm:$0xff] %vm36, %v35
  $region13: #{slowfast_spatial_temporal_module.3} parent=0 // pred_fallthru
    _
  // Predicated region
  $region14: #{slowfast_spatial_temporal_module.3} parent=0 // pred_check
    _
  $region15: #{slowfast_spatial_temporal_module.3} parent=0 // pred_check_branch
    %39 = sbr.rel (0) target = $region17
  $region16: #{slowfast_spatial_temporal_module.3} parent=0 // pred_region
    _
  $region17: #{slowfast_spatial_temporal_module.3} parent=0 // pred_fallthru
    _
  // Predicated region
  $region18: #{slowfast_spatial_temporal_module.3} parent=0 // pred_check
    _
  $region19: #{slowfast_spatial_temporal_module.3} parent=0 // pred_check_branch
    %41 = sbr.rel (0) target = $region21
  $region20: #{slowfast_spatial_temporal_module.3} parent=0 // pred_region
    _
  $region21: #{slowfast_spatial_temporal_module.3} parent=0 // pred_fallthru
    _

</llo_original>
